<compile_context>
chip_gen: v7x
topology: tpu7x:2x2x1
jax: 0.10.0
libtpu: 0.0.40
codegen_flags: <defaults>
</compile_context>

<pallas_src>
import math
import functools

import jax
import jax.numpy as jnp
from jax.experimental import pallas as pl
from jax.experimental.pallas import tpu as pltpu

D_MODEL = 30
DROPOUT_P = 0.1
MAX_LEN = 64        # module default is 5000; 64 is plenty for the demo
LANE = 128
MAX_TILE_ROWS = 512  # (tile rows, 128) f32 -> 256 KiB/tile; 4 tiles x 2 bufs ~ 2 MiB VMEM


def _round_up(x: int, m: int) -> int:
    return ((x + m - 1) // m) * m


def _build_pe_table(max_len: int, d_model: int) -> jnp.ndarray:
    """Replicates the PyTorch buffer: pe[max_len, 1, d_model]."""
    position = jnp.arange(max_len, dtype=jnp.float32)[:, None]            # [L, 1]
    div_term = jnp.exp(
        jnp.arange(0, d_model, 2, dtype=jnp.float32) * (-math.log(10000.0) / d_model)
    )                                                                      # [ceil(D/2)]
    pe = jnp.zeros((max_len, d_model), dtype=jnp.float32)
    pe = pe.at[:, 0::2].set(jnp.sin(position * div_term))
    pe = pe.at[:, 1::2].set(jnp.cos(position * div_term))
    return pe[:, None, :]                                                  # [L, 1, D]


# ---------------------------------------------------------------------------
# Kernels (operate on lane-dense [tile_rows, 128] blocks)
# ---------------------------------------------------------------------------

def _pe_add_kernel(x_ref, pe_ref, o_ref):
    # Eval path: pure add + store (HBM-bandwidth bound).
    o_ref[...] = x_ref[...] + pe_ref[...]


def _pe_dropout_kernel(x_ref, pe_ref, bits_ref, o_ref, *, p: float):
    # Training path: add + integer-threshold dropout.
    y = x_ref[...] + pe_ref[...]
    threshold = jnp.uint32(min(int(round(p * (2 ** 32))), (2 ** 32) - 1))
    keep = bits_ref[...] >= threshold                 # P(keep) = 1 - p
    scale = jnp.float32(1.0 / (1.0 - p))
    o_ref[...] = jnp.where(keep, y * scale, jnp.zeros_like(y)).astype(o_ref.dtype)


# ---------------------------------------------------------------------------
# Wrapper
# ---------------------------------------------------------------------------

def positional_encoding(x: jnp.ndarray,
                        pe_table: jnp.ndarray,
                        key: jax.Array | None = None,
                        p: float = DROPOUT_P,
                        training: bool = True) -> jnp.ndarray:
    """x: [seq_len, batch, d_model] float32.  Returns dropout(x + pe[:seq_len])."""
    S, B, D = x.shape
    pe = jnp.broadcast_to(pe_table[:S], (S, B, D)).astype(x.dtype)

    # ---- layout plumbing: flatten + pad to a lane-dense [rows, 128] slab ----
    n = S * B * D
    rows = pl.cdiv(n, LANE)
    tile_rows = min(MAX_TILE_ROWS, _round_up(rows, 8))
    padded_rows = _round_up(rows, tile_rows)
    padded_n = padded_rows * LANE

    def to_slab(a):
        flat = a.reshape(-1)
        flat = jnp.pad(flat, (0, padded_n - n))
        return flat.reshape(padded_rows, LANE)

    x2 = to_slab(x)
    pe2 = to_slab(pe)

    grid = (padded_rows // tile_rows,)
    blk = pl.BlockSpec((tile_rows, LANE), lambda i: (i, 0))

    use_dropout = training and p > 0.0
    if use_dropout:
        if key is None:
            key = jax.random.PRNGKey(0)
        bits = jax.random.bits(key, (padded_rows, LANE), dtype=jnp.uint32)
        kernel = functools.partial(_pe_dropout_kernel, p=float(p))
        inputs = (x2, pe2, bits)
        in_specs = [blk, blk, blk]
    else:
        kernel = _pe_add_kernel
        inputs = (x2, pe2)
        in_specs = [blk, blk]

    out2 = pl.pallas_call(
        kernel,
        out_shape=jax.ShapeDtypeStruct((padded_rows, LANE), x.dtype),
        grid=grid,
        in_specs=in_specs,
        out_specs=blk,
        compiler_params=pltpu.CompilerParams(
            dimension_semantics=("parallel",)),
    )(*inputs)

    return out2.reshape(-1)[:n].reshape(S, B, D)


if __name__ == "__main__":
    key = jax.random.PRNGKey(0)
    k_x, k_drop = jax.random.split(key)

    seq_len, batch, d_model = 8, 4, D_MODEL
    x = jax.random.normal(k_x, (seq_len, batch, d_model), dtype=jnp.float32)
    pe_table = _build_pe_table(MAX_LEN, d_model)

    # Eval-mode forward (dropout is identity) — exact check vs. pure JAX ref.
    out_eval = positional_encoding(x, pe_table, training=False)
    out_eval = jax.block_until_ready(out_eval)
    ref_eval = x + pe_table[:seq_len]
    assert out_eval.shape == (seq_len, batch, d_model)
    assert jnp.allclose(out_eval, ref_eval, atol=1e-6), "eval-mode mismatch"

    # Training-mode forward (dropout active, deterministic given the key).
    out_train = positional_encoding(x, pe_table, key=k_drop,
                                    p=DROPOUT_P, training=True)
    out_train = jax.block_until_ready(out_train)
    assert out_train.shape == (seq_len, batch, d_model)

    # Every kept element must equal (x + pe) / (1 - p); dropped elements are 0.
    scale = 1.0 / (1.0 - DROPOUT_P)
    ref_scaled = ref_eval * scale
    train_check = jnp.where(out_train == 0, ref_scaled, out_train)
    assert jnp.allclose(train_check, ref_scaled, atol=1e-5), "train-mode mismatch"

    print("KERNEL_OK")
</pallas_src>

<mosaic_0001>
module attributes {stable_mosaic.version = 11 : i64} {
  func.func @_pe_add_kernel(%arg0: i32, %arg1: memref<8x128xf32, #tpu.memory_space<vmem>>, %arg2: memref<8x128xf32, #tpu.memory_space<vmem>>, %arg3: memref<8x128xf32, #tpu.memory_space<vmem>>) attributes {dimension_semantics = [#tpu.dimension_semantics<parallel>], iteration_bounds = array<i64: 1>, scalar_prefetch = 0 : i64, scratch_operands = 0 : i64, tpu.core_type = #tpu.core_type<tc>, window_params = [{transform_indices = @transform_0, window_bounds = array<i64: 8, 128>}, {transform_indices = @transform_1, window_bounds = array<i64: 8, 128>}, {transform_indices = @transform_2, window_bounds = array<i64: 8, 128>}]} {
    %c0 = arith.constant 0 : index
    %c0_0 = arith.constant 0 : index
    %0 = vector.load %arg1[%c0, %c0_0] : memref<8x128xf32, #tpu.memory_space<vmem>>, vector<8x128xf32>
    %c0_1 = arith.constant 0 : index
    %c0_2 = arith.constant 0 : index
    %1 = vector.load %arg2[%c0_1, %c0_2] : memref<8x128xf32, #tpu.memory_space<vmem>>, vector<8x128xf32>
    %2 = arith.addf %0, %1 : vector<8x128xf32>
    %c0_3 = arith.constant 0 : index
    %c0_4 = arith.constant 0 : index
    %3 = vector.load %arg3[%c0_3, %c0_4] : memref<8x128xf32, #tpu.memory_space<vmem>>, vector<8x128xf32>
    tpu.vector_store %arg3[%c0_3, %c0_4], %2 {strides = array<i32>} : memref<8x128xf32, #tpu.memory_space<vmem>>, vector<8x128xf32>,
    return
  }
  func.func @transform_0(%arg0: i32) -> (i32, i32) {
    %c0_i32 = arith.constant 0 : i32
    %c0_i32_0 = arith.constant 0 : i32
    return %arg0, %c0_i32 : i32, i32
  }
  func.func @transform_1(%arg0: i32) -> (i32, i32) {
    %c0_i32 = arith.constant 0 : i32
    %c0_i32_0 = arith.constant 0 : i32
    return %arg0, %c0_i32 : i32, i32
  }
  func.func @transform_2(%arg0: i32) -> (i32, i32) {
    %c0_i32 = arith.constant 0 : i32
    %c0_i32_0 = arith.constant 0 : i32
    return %arg0, %c0_i32 : i32, i32
  }
}

</mosaic_0001>

<llo_original>
// kernel: tpu_custom_call.1
$region0: #{tpu_custom_call.1}
  #allocation0 [shape = 'u32[]', space=smem, size = 0x4, offset = 0x4, fixed_abs, tag = 'smem constant byte address 0x4 - core index']
  #allocation1 [shape = 'u32[144,128]{1,0:T(1,128)}', space=vmem, size = 0x12000, scoped, tag = 'internal scratch']
  %s0 = inlined_call_operand.hbm [shape: f32[8,128], index: 0, kind: input, shape index: {}]
  %s1 = inlined_call_operand.hbm [shape: f32[8,128], index: 1, kind: input, shape index: {}]
  %s2 = inlined_call_operand.hbm [shape: f32[8,128], index: 2, kind: output, shape index: {}]
  %s3 = sld [smem:[#allocation0]]
  $region26: #{tpu_custom_call.1} parent=0
    _
  %s5 = ssub.s32 1, %s3
  %s6 = scalar_select 0, %s5, %s3
  $region1: #{tpu_custom_call.1} parent=0
    #allocation2 [shape = 'u8[4096]{0}', space=vmem, size = 0x1000, scoped, tag = 'input window, operand 0, single buffered']
    #allocation3 [shape = 's32[1]{0}', space=sflag, size = 0x4, scoped, tag = 'scoped memory for tpu_custom_call.1']
    #allocation4 [shape = 's32[1]{0}', space=sflag, size = 0x4, scoped, tag = 'scoped memory for tpu_custom_call.1']
    #allocation5 [shape = 'u8[4096]{0}', space=vmem, size = 0x1000, scoped, tag = 'input window, operand 1, single buffered']
    #allocation6 [shape = 's32[1]{0}', space=sflag, size = 0x4, scoped, tag = 'scoped memory for tpu_custom_call.1']
    #allocation7 [shape = 'u8[4096]{0}', space=vmem, size = 0x1000, scoped, tag = 'output window, operand 0, single buffered']
    %7 = vsyncpa [#allocation3], 0
    %8 = vsyncpa [#allocation6], 0
    %9 = vsyncpa [#allocation4], 0
    // Predicated region
    $region2: #{tpu_custom_call.1} parent=1 // pred_check
      _
    $region3: #{tpu_custom_call.1} parent=1 // pred_check_branch
      %11 = sbr.rel (0) target = $region5
    $region4: #{tpu_custom_call.1} parent=1 // pred_region
      %s13 = ssub.s32 128, 128
      %14 = vsyncadd [#allocation3], %s13
      %s16 = sshll.u32 [#allocation2], 4
      %s17 = int_to_ptr.vmem [resolvable:$true] %s16
      %19 = dma.hbm_to_vmem [thread:$0]  %s0, 128, %s17, [#allocation3]
    $region5: #{tpu_custom_call.1} parent=1 // pred_fallthru
      _
    // Predicated region
    $region6: #{tpu_custom_call.1} parent=1 // pred_check
      _
    $region7: #{tpu_custom_call.1} parent=1 // pred_check_branch
      %21 = sbr.rel (0) target = $region9
    $region8: #{tpu_custom_call.1} parent=1 // pred_region
      %s23 = ssub.s32 128, 128
      %24 = vsyncadd [#allocation6], %s23
      %s26 = sshll.u32 [#allocation5], 4
      %s27 = int_to_ptr.vmem [resolvable:$true] %s26
      %29 = dma.hbm_to_vmem [thread:$0]  %s1, 128, %s27, [#allocation6]
    $region9: #{tpu_custom_call.1} parent=1 // pred_fallthru
      _
    // Predicated region
    $region10: #{tpu_custom_call.1} parent=1 // pred_check
      _
    $region11: #{tpu_custom_call.1} parent=1 // pred_check_branch
      %31 = sbr.rel (0) target = $region13
    $region12: #{tpu_custom_call.1} parent=1 // pred_region
      %32 = dma.done [#allocation3], 128
    $region13: #{tpu_custom_call.1} parent=1 // pred_fallthru
      _
    // Predicated region
    $region14: #{tpu_custom_call.1} parent=1 // pred_check
      _
    $region15: #{tpu_custom_call.1} parent=1 // pred_check_branch
      %34 = sbr.rel (0) target = $region17
    $region16: #{tpu_custom_call.1} parent=1 // pred_region
      %35 = dma.done [#allocation6], 128
    $region17: #{tpu_custom_call.1} parent=1 // pred_fallthru
      _
    %v36 = vld [vmem:[#allocation2] sm:$0xff]
    %v37 = vld [vmem:[#allocation5] sm:$0xff]
    %v38 = vadd.f32 %v36, %v37
    %39 = vst [vmem:[#allocation7] sm:$0xff] %v38
    // Predicated region
    $region18: #{tpu_custom_call.1} parent=1 // pred_check
      _
    $region19: #{tpu_custom_call.1} parent=1 // pred_check_branch
      %41 = sbr.rel (0) target = $region21
    $region20: #{tpu_custom_call.1} parent=1 // pred_region
      %s43 = ssub.s32 128, 128
      %44 = vsyncadd [#allocation4], %s43
      %s46 = sshll.u32 [#allocation7], 4
      %s47 = int_to_ptr.vmem [resolvable:$true] %s46
      %49 = dma.vmem_to_hbm [thread:$0]  %s47, 128, %s2, [#allocation4]
    $region21: #{tpu_custom_call.1} parent=1 // pred_fallthru
      _
    // Predicated region
    $region22: #{tpu_custom_call.1} parent=1 // pred_check
      _
    $region23: #{tpu_custom_call.1} parent=1 // pred_check_branch
      %51 = sbr.rel (0) target = $region25
    $region24: #{tpu_custom_call.1} parent=1 // pred_region
      %52 = dma.done [#allocation4], 128
    $region25: #{tpu_custom_call.1} parent=1 // pred_fallthru
      _
    %53 = vsyncpa [#allocation3], 1
    %54 = vsyncpa [#allocation6], 1
    %55 = vsyncpa [#allocation4], 1

</llo_original>
